<compile_context>
chip_gen: v7x
topology: tpu7x:2x2x1
jax: 0.10.0
libtpu: 0.0.40
codegen_flags: <defaults>
</compile_context>

<pallas_src>
import math
import jax
import jax.numpy as jnp
from jax.experimental import pallas as pl
from jax.experimental.pallas import tpu as pltpu


INPUT_DIM = 3
HIDDEN_DIMS = [64, 128, 64]
OUTPUT_DIM = 1

K_PAD = 8            # input features padded 3 -> 8; row 3 is the ones-row (b1 fold)
HEAD_PAD = 8         # head output rows padded 1 -> 8 (avoid M=1 matmul); row 0 real
DEFAULT_TB = 4096    # max batch-tile (lane) width per grid step, multiple of 128


def _cdiv(a, b):
    return -(-a // b)


def _round_up(n, m):
    return ((n + m - 1) // m) * m


def _mlp_kernel(x_ref,
                w1_ref,
                w2_ref, b2_ref,
                w3_ref, b3_ref,
                w4_ref, b4_ref,
                o_ref):
    """One (K_PAD, TB) batch tile -> (1, TB) lane-dense output tile."""
    cdt = w1_ref.dtype                               # compute dtype (f32 or bf16)

    x = x_ref[...]                                   # (K_PAD, TB), already cdt

    # layer 1: Linear(3->64) + ReLU   (b1 folded into x's ones-row / w1 col 3)
    h = jnp.dot(w1_ref[...], x, preferred_element_type=jnp.float32)
    h = jnp.maximum(h.astype(cdt), 0.0)              # (64, TB)

    # layer 2: Linear(64->128) + ReLU
    h = jnp.dot(w2_ref[...], h, preferred_element_type=jnp.float32)
    h = jnp.maximum(h.astype(cdt) + b2_ref[...], 0.0)  # (128, TB)

    # layer 3: Linear(128->64) + ReLU
    h = jnp.dot(w3_ref[...], h, preferred_element_type=jnp.float32)
    h = jnp.maximum(h.astype(cdt) + b3_ref[...], 0.0)  # (64, TB)

    # head: Linear(64->1); w4 is padded to 8 output rows, only row 0 is real.
    out = jnp.dot(w4_ref[...], h, preferred_element_type=jnp.float32)
    out = out + b4_ref[...]                          # (HEAD_PAD, TB), f32
    o_ref[...] = out[0:1, :].astype(o_ref.dtype)     # lane-dense (1, TB) store


def gravity_predictor_forward(x, kparams, *, tb=None):
    """x: (B, INPUT_DIM) float32. kparams: dict from prepare_params()."""
    B = x.shape[0]
    cdt = kparams["w1"].dtype

    if tb is None:
        # Big tiles amortize the ~0.35us/step overhead; cap at DEFAULT_TB.
        # Also aim for >= 2 grid steps so v7x's two TensorCores both get work.
        tb = min(DEFAULT_TB, max(128, _round_up(_cdiv(max(B, 1), 2), 128)))
    Bp = _round_up(max(B, 1), tb)
    if Bp // tb < 2:
        Bp = 2 * tb                                   # guarantee >= 2 grid steps

    # Feature-major, zero-padded input; row INPUT_DIM is the constant ones-row
    # used to fold b1 into the layer-1 matmul.
    xp = jnp.zeros((K_PAD, Bp), cdt)
    xp = xp.at[:INPUT_DIM, :B].set(x.T.astype(cdt))
    xp = xp.at[INPUT_DIM, :].set(1.0)

    weight_args = (kparams["w1"],
                   kparams["w2"], kparams["b2"],
                   kparams["w3"], kparams["b3"],
                   kparams["w4"], kparams["b4"])

    in_specs = [pl.BlockSpec((K_PAD, tb), lambda i: (0, i))]
    # Weights/biases: same (only) block every step -> resident in VMEM.
    in_specs += [pl.BlockSpec(tuple(w.shape), lambda i: (0, 0))
                 for w in weight_args]
    out_spec = pl.BlockSpec((1, tb), lambda i: (0, i))

    flops = 2 * Bp * (K_PAD * HIDDEN_DIMS[0]
                      + HIDDEN_DIMS[0] * HIDDEN_DIMS[1]
                      + HIDDEN_DIMS[1] * HIDDEN_DIMS[2]
                      + HIDDEN_DIMS[2] * HEAD_PAD)
    wbytes = sum(int(w.size) * w.dtype.itemsize for w in weight_args)
    bytes_accessed = (Bp * K_PAD * xp.dtype.itemsize   # input slab
                      + Bp * 4                         # packed (1, Bp) f32 out
                      + wbytes)

    out = pl.pallas_call(
        _mlp_kernel,
        out_shape=jax.ShapeDtypeStruct((1, Bp), jnp.float32),
        grid=(Bp // tb,),
        in_specs=in_specs,
        out_specs=out_spec,
        compiler_params=pltpu.CompilerParams(
            dimension_semantics=("parallel",),
            vmem_limit_bytes=48 * 1024 * 1024),
        cost_estimate=pl.CostEstimate(
            flops=flops, transcendentals=0, bytes_accessed=bytes_accessed),
    )(xp, *weight_args)

    return out[0, :B].reshape(B, OUTPUT_DIM)


# ----------------------------- parameters ----------------------------------

def _linear_init(key, fan_in, fan_out):
    """PyTorch-style nn.Linear init; logical weight stored as (in, out)."""
    kw, kb = jax.random.split(key)
    bound = 1.0 / math.sqrt(fan_in)
    w = jax.random.uniform(kw, (fan_in, fan_out), jnp.float32, -bound, bound)
    b = jax.random.uniform(kb, (1, fan_out), jnp.float32, -bound, bound)
    return w, b


def init_params(seed=0):
    """Logical (unpadded) parameters, matching the PyTorch module layout."""
    key = jax.random.PRNGKey(seed)
    keys = jax.random.split(key, 4)
    w1, b1 = _linear_init(keys[0], INPUT_DIM, HIDDEN_DIMS[0])
    w2, b2 = _linear_init(keys[1], HIDDEN_DIMS[0], HIDDEN_DIMS[1])
    w3, b3 = _linear_init(keys[2], HIDDEN_DIMS[1], HIDDEN_DIMS[2])
    w4, b4 = _linear_init(keys[3], HIDDEN_DIMS[2], OUTPUT_DIM)
    return dict(w1=w1, b1=b1, w2=w2, b2=b2, w3=w3, b3=b3, w4=w4, b4=b4)


def prepare_params(params, compute_dtype=jnp.bfloat16):
    """Feature-major (out, in) weights for the kernel's W @ h layout.

    * w1 padded K 3->8 with b1 folded into column INPUT_DIM (ones-row of x).
    * w4/b4 padded to HEAD_PAD output rows (row 0 real, rest zero).
    * matmul operands + hidden biases in compute_dtype (bf16 default; f32 MXU
      accumulation in-kernel); head bias stays f32.
    """
    w1 = jnp.zeros((HIDDEN_DIMS[0], K_PAD), jnp.float32)
    w1 = w1.at[:, :INPUT_DIM].set(params["w1"].T)
    w1 = w1.at[:, INPUT_DIM].set(params["b1"].reshape(-1))      # fold b1

    w4 = jnp.zeros((HEAD_PAD, HIDDEN_DIMS[2]), jnp.float32)
    w4 = w4.at[:OUTPUT_DIM, :].set(params["w4"].T)
    b4 = jnp.zeros((HEAD_PAD, 1), jnp.float32)
    b4 = b4.at[:OUTPUT_DIM, :].set(params["b4"].reshape(OUTPUT_DIM, 1))

    return dict(
        w1=w1.astype(compute_dtype),
        w2=params["w2"].T.astype(compute_dtype),
        b2=params["b2"].reshape(-1, 1).astype(compute_dtype),
        w3=params["w3"].T.astype(compute_dtype),
        b3=params["b3"].reshape(-1, 1).astype(compute_dtype),
        w4=w4.astype(compute_dtype),
        b4=b4,                                                   # f32 head bias
    )


def _reference_forward(x, p):
    """Pure-JAX f32 reference with identical (eval-mode) semantics."""
    h = jnp.maximum(x @ p["w1"] + p["b1"], 0.0)
    h = jnp.maximum(h @ p["w2"] + p["b2"], 0.0)
    h = jnp.maximum(h @ p["w3"] + p["b3"], 0.0)
    return h @ p["w4"] + p["b4"]


if __name__ == "__main__":
    B = 8  # small batch of (x, y, z) field-query points
    key = jax.random.PRNGKey(0)
    x = jax.random.normal(key, (B, INPUT_DIM), jnp.float32)

    params = init_params(seed=0)
    ref = _reference_forward(x, params)

    # f32 operand path: eval-mode semantics, tight tolerance.
    kp_f32 = prepare_params(params, jnp.float32)
    out_f32 = jax.block_until_ready(gravity_predictor_forward(x, kp_f32))
    assert out_f32.shape == (B, OUTPUT_DIM)
    assert jnp.allclose(out_f32, ref, atol=1e-4, rtol=1e-4)

    # bf16 operands + f32 accumulation: default / fast path on all generations.
    kp_bf16 = prepare_params(params)  # bf16 default
    out_bf16 = jax.block_until_ready(gravity_predictor_forward(x, kp_bf16))
    assert out_bf16.shape == (B, OUTPUT_DIM)
    assert jnp.allclose(out_bf16, ref, atol=5e-2, rtol=5e-2)

    print("KERNEL_OK")
</pallas_src>

<mosaic_0001>
module attributes {stable_mosaic.version = 11 : i64} {
  func.func @_mlp_kernel(%arg0: i32, %arg1: memref<8x128xf32, #tpu.memory_space<vmem>>, %arg2: memref<64x8xf32, #tpu.memory_space<vmem>>, %arg3: memref<128x64xf32, #tpu.memory_space<vmem>>, %arg4: memref<128x1xf32, #tpu.memory_space<vmem>>, %arg5: memref<64x128xf32, #tpu.memory_space<vmem>>, %arg6: memref<64x1xf32, #tpu.memory_space<vmem>>, %arg7: memref<8x64xf32, #tpu.memory_space<vmem>>, %arg8: memref<8x1xf32, #tpu.memory_space<vmem>>, %arg9: memref<1x128xf32, #tpu.memory_space<vmem>>) attributes {dimension_semantics = [#tpu.dimension_semantics<parallel>], iteration_bounds = array<i64: 2>, scalar_prefetch = 0 : i64, scratch_operands = 0 : i64, tpu.core_type = #tpu.core_type<tc>, window_params = [{transform_indices = @transform_0, window_bounds = array<i64: 8, 128>}, {pipeline_mode = #tpu.pipeline_mode<synchronous>, transform_indices = @transform_1, window_bounds = array<i64: 64, 8>}, {pipeline_mode = #tpu.pipeline_mode<synchronous>, transform_indices = @transform_2, window_bounds = array<i64: 128, 64>}, {pipeline_mode = #tpu.pipeline_mode<synchronous>, transform_indices = @transform_3, window_bounds = array<i64: 128, 1>}, {pipeline_mode = #tpu.pipeline_mode<synchronous>, transform_indices = @transform_4, window_bounds = array<i64: 64, 128>}, {pipeline_mode = #tpu.pipeline_mode<synchronous>, transform_indices = @transform_5, window_bounds = array<i64: 64, 1>}, {pipeline_mode = #tpu.pipeline_mode<synchronous>, transform_indices = @transform_6, window_bounds = array<i64: 8, 64>}, {pipeline_mode = #tpu.pipeline_mode<synchronous>, transform_indices = @transform_7, window_bounds = array<i64: 8, 1>}, {transform_indices = @transform_8, window_bounds = array<i64: 1, 128>}]} {
    %c0 = arith.constant 0 : index
    %c0_0 = arith.constant 0 : index
    %0 = vector.load %arg1[%c0, %c0_0] : memref<8x128xf32, #tpu.memory_space<vmem>>, vector<8x128xf32>
    %c0_1 = arith.constant 0 : index
    %c0_2 = arith.constant 0 : index
    %1 = vector.load %arg2[%c0_1, %c0_2] : memref<64x8xf32, #tpu.memory_space<vmem>>, vector<64x8xf32>
    %cst = arith.constant dense<0.000000e+00> : vector<64x128xf32>
    %2 = tpu.matmul %1, %0, %cst {dimension_numbers = #tpu.dot_dimension_numbers<[1], [0], [0], [1], [0, 0, 1, 1], [], []>} : vector<64x8xf32>, vector<8x128xf32>, vector<64x128xf32> -> vector<64x128xf32>
    %cst_3 = arith.constant 0.000000e+00 : f32
    %3 = vector.broadcast %cst_3 : f32 to vector<64x128xf32>
    %4 = arith.maximumf %2, %3 : vector<64x128xf32>
    %c0_4 = arith.constant 0 : index
    %c0_5 = arith.constant 0 : index
    %5 = vector.load %arg3[%c0_4, %c0_5] : memref<128x64xf32, #tpu.memory_space<vmem>>, vector<128x64xf32>
    %cst_6 = arith.constant dense<0.000000e+00> : vector<128x128xf32>
    %6 = tpu.matmul %5, %4, %cst_6 {dimension_numbers = #tpu.dot_dimension_numbers<[1], [0], [0], [1], [0, 0, 1, 1], [], []>} : vector<128x64xf32>, vector<64x128xf32>, vector<128x128xf32> -> vector<128x128xf32>
    %c0_7 = arith.constant 0 : index
    %c0_8 = arith.constant 0 : index
    %7 = vector.load %arg4[%c0_7, %c0_8] : memref<128x1xf32, #tpu.memory_space<vmem>>, vector<128x1xf32>
    %8 = vector.broadcast %7 : vector<128x1xf32> to vector<128x128xf32>
    %9 = arith.addf %6, %8 : vector<128x128xf32>
    %cst_9 = arith.constant 0.000000e+00 : f32
    %10 = vector.broadcast %cst_9 : f32 to vector<128x128xf32>
    %11 = arith.maximumf %9, %10 : vector<128x128xf32>
    %c0_10 = arith.constant 0 : index
    %c0_11 = arith.constant 0 : index
    %12 = vector.load %arg5[%c0_10, %c0_11] : memref<64x128xf32, #tpu.memory_space<vmem>>, vector<64x128xf32>
    %cst_12 = arith.constant dense<0.000000e+00> : vector<64x128xf32>
    %13 = tpu.matmul %12, %11, %cst_12 {dimension_numbers = #tpu.dot_dimension_numbers<[1], [0], [0], [1], [0, 0, 1, 1], [], []>} : vector<64x128xf32>, vector<128x128xf32>, vector<64x128xf32> -> vector<64x128xf32>
    %c0_13 = arith.constant 0 : index
    %c0_14 = arith.constant 0 : index
    %14 = vector.load %arg6[%c0_13, %c0_14] : memref<64x1xf32, #tpu.memory_space<vmem>>, vector<64x1xf32>
    %15 = vector.broadcast %14 : vector<64x1xf32> to vector<64x128xf32>
    %16 = arith.addf %13, %15 : vector<64x128xf32>
    %cst_15 = arith.constant 0.000000e+00 : f32
    %17 = vector.broadcast %cst_15 : f32 to vector<64x128xf32>
    %18 = arith.maximumf %16, %17 : vector<64x128xf32>
    %c0_16 = arith.constant 0 : index
    %c0_17 = arith.constant 0 : index
    %19 = vector.load %arg7[%c0_16, %c0_17] : memref<8x64xf32, #tpu.memory_space<vmem>>, vector<8x64xf32>
    %cst_18 = arith.constant dense<0.000000e+00> : vector<8x128xf32>
    %20 = tpu.matmul %19, %18, %cst_18 {dimension_numbers = #tpu.dot_dimension_numbers<[1], [0], [0], [1], [0, 0, 1, 1], [], []>} : vector<8x64xf32>, vector<64x128xf32>, vector<8x128xf32> -> vector<8x128xf32>
    %c0_19 = arith.constant 0 : index
    %c0_20 = arith.constant 0 : index
    %21 = vector.load %arg8[%c0_19, %c0_20] : memref<8x1xf32, #tpu.memory_space<vmem>>, vector<8x1xf32>
    %22 = vector.broadcast %21 : vector<8x1xf32> to vector<8x128xf32>
    %23 = arith.addf %20, %22 : vector<8x128xf32>
    %24 = vector.extract_strided_slice %23 {offsets = [0, 0], sizes = [1, 128], strides = [1, 1]} : vector<8x128xf32> to vector<1x128xf32>
    %c0_21 = arith.constant 0 : index
    %c0_22 = arith.constant 0 : index
    %25 = vector.load %arg9[%c0_21, %c0_22] : memref<1x128xf32, #tpu.memory_space<vmem>>, vector<1x128xf32>
    tpu.vector_store %arg9[%c0_21, %c0_22], %24 {strides = array<i32>} : memref<1x128xf32, #tpu.memory_space<vmem>>, vector<1x128xf32>,
    return
  }
  func.func @transform_0(%arg0: i32) -> (i32, i32) {
    %c0_i32 = arith.constant 0 : i32
    %c0_i32_0 = arith.constant 0 : i32
    return %c0_i32, %arg0 : i32, i32
  }
  func.func @transform_1(%arg0: i32) -> (i32, i32) {
    %c0_i32 = arith.constant 0 : i32
    %c0_i32_0 = arith.constant 0 : i32
    %c0_i32_1 = arith.constant 0 : i32
    return %c0_i32, %c0_i32_0 : i32, i32
  }
  func.func @transform_2(%arg0: i32) -> (i32, i32) {
    %c0_i32 = arith.constant 0 : i32
    %c0_i32_0 = arith.constant 0 : i32
    %c0_i32_1 = arith.constant 0 : i32
    return %c0_i32, %c0_i32_0 : i32, i32
  }
  func.func @transform_3(%arg0: i32) -> (i32, i32) {
    %c0_i32 = arith.constant 0 : i32
    %c0_i32_0 = arith.constant 0 : i32
    %c0_i32_1 = arith.constant 0 : i32
    return %c0_i32, %c0_i32_0 : i32, i32
  }
  func.func @transform_4(%arg0: i32) -> (i32, i32) {
    %c0_i32 = arith.constant 0 : i32
    %c0_i32_0 = arith.constant 0 : i32
    %c0_i32_1 = arith.constant 0 : i32
    return %c0_i32, %c0_i32_0 : i32, i32
  }
  func.func @transform_5(%arg0: i32) -> (i32, i32) {
    %c0_i32 = arith.constant 0 : i32
    %c0_i32_0 = arith.constant 0 : i32
    %c0_i32_1 = arith.constant 0 : i32
    return %c0_i32, %c0_i32_0 : i32, i32
  }
  func.func @transform_6(%arg0: i32) -> (i32, i32) {
    %c0_i32 = arith.constant 0 : i32
    %c0_i32_0 = arith.constant 0 : i32
    %c0_i32_1 = arith.constant 0 : i32
    return %c0_i32, %c0_i32_0 : i32, i32
  }
  func.func @transform_7(%arg0: i32) -> (i32, i32) {
    %c0_i32 = arith.constant 0 : i32
    %c0_i32_0 = arith.constant 0 : i32
    %c0_i32_1 = arith.constant 0 : i32
    return %c0_i32, %c0_i32_0 : i32, i32
  }
  func.func @transform_8(%arg0: i32) -> (i32, i32) {
    %c0_i32 = arith.constant 0 : i32
    %c0_i32_0 = arith.constant 0 : i32
    return %c0_i32, %arg0 : i32, i32
  }
}

</mosaic_0001>

<llo_original>
// kernel: tpu_custom_call.1
$region0: #{tpu_custom_call.1}
  #allocation0 [shape = 'u32[]', space=smem, size = 0x4, offset = 0x4, fixed_abs, tag = 'smem constant byte address 0x4 - core index']
  #allocation1 [shape = 'u32[144,128]{1,0:T(1,128)}', space=vmem, size = 0x12000, scoped, tag = 'internal scratch']
  %s0 = inlined_call_operand.vmem [shape: f32[8,256], index: 0, kind: input, shape index: {}]
  %s1 = inlined_call_operand.vmem [shape: f32[64,8], index: 1, kind: input, shape index: {}]
  %s2 = inlined_call_operand.vmem [shape: f32[128,64], index: 2, kind: input, shape index: {}]
  %s3 = inlined_call_operand.vmem [shape: f32[128,1], index: 3, kind: input, shape index: {}]
  %s4 = inlined_call_operand.vmem [shape: f32[64,128], index: 4, kind: input, shape index: {}]
  %s5 = inlined_call_operand.vmem [shape: f32[64,1], index: 5, kind: input, shape index: {}]
  %s6 = inlined_call_operand.vmem [shape: f32[8,64], index: 6, kind: input, shape index: {}]
  %s7 = inlined_call_operand.vmem [shape: f32[8,1], index: 7, kind: input, shape index: {}]
  %s8 = inlined_call_operand.hbm [shape: f32[1,256], index: 8, kind: output, shape index: {}]
  %s9 = sld [smem:[#allocation0]]
  $region65: #{tpu_custom_call.1} parent=0
    _
  %s11 = ssub.s32 1, %s9
  %s12 = scalar_select 0, %s11, %s9
  $region1: #{tpu_custom_call.1} parent=0
    #allocation2 [shape = 'u8[1024]{0}', space=vmem, size = 0x400, scoped, tag = 'output window, operand 0']
    #allocation3 [shape = 's32[2]{0}', space=sflag, size = 0x8, scoped, tag = 'scoped memory for tpu_custom_call.1']
    %13 = vsyncpa [#allocation3], 0
    %s14 = scalar_lea.sflag [#allocation3], 1
    %15 = vsyncpa %s14, 0
    loop: start=0, step=1, limit=4
    $region2: #{tpu_custom_call.1} parent=1 // loop_pre_header
      _
    $region3: #{tpu_custom_call.1} parent=1 // loop_header
      %s17 = sphi 0, %s21
      %p18 = scmp.ge.s32.totalorder %s17, 4
      %s27 = sphi 0, %s29
      %s30 = sphi 0, %s27
      %s31 = sphi 0, %s30
      %s47 = sphi 0, %s31
      %s51 = sphi 0, %s51
      %s53 = sphi 0, %s51
      %s54 = sphi 0, %s53
      %s68 = sphi 0, %s54
      %s72 = sphi 0, %s72
      %s74 = sphi 0, %s72
      %s75 = sphi 0, %s74
      %s89 = sphi 0, %s75
      %s93 = sphi 0, %s93
      %s95 = sphi 0, %s93
      %s96 = sphi 0, %s95
      %s110 = sphi 0, %s96
      %s114 = sphi 0, %s114
      %s116 = sphi 0, %s114
      %s117 = sphi 0, %s116
      %s131 = sphi 0, %s117
      %s135 = sphi 0, %s135
      %s137 = sphi 0, %s135
      %s138 = sphi 0, %s137
      %s152 = sphi 0, %s138
      %s156 = sphi 0, %s156
      %s158 = sphi 0, %s156
      %s159 = sphi 0, %s158
      %s173 = sphi 0, %s159
      %s177 = sphi 0, %s177
      %s179 = sphi 0, %s177
      %s180 = sphi 0, %s179
      %s194 = sphi 0, %s180
      %s200 = sphi 0, %s202
      %s203 = sphi 0, %s200
      %s204 = sphi 0, %s203
      %s220 = sphi 0, %s204
    $region4: #{tpu_custom_call.1} parent=1 // loop_header_branch
      %20 = sbr.rel (%p18) target = $region8
    $region5: #{tpu_custom_call.1} parent=1 // loop_body
      %s22 = ssub.s32 %s17, 1
      %s23 = ssub.s32 %s17, 2
      %s24 = sadd.s32 %s17, 1
      %s25 = ssub.s32 %s17, %s24
      %p26 = scmp.eq.s32.totalorder %s25, 0
      %s28 = sadd.s32 %s27, 1
      %s29 = scalar_select %p26, %s27, %s28
      %p32 = pneg %p26
      %p33 = scmp.eq.s32.totalorder %s17, 1
      %p34 = por %p32, %p33
      %p35 = scmp.ne.s32.totalorder %s27, %s30
      %p36 = scmp.eq.s32.totalorder %s17, 0
      %p37 = por %p35, %p36
      %p38 = scmp.ne.s32.totalorder %s27, %s30
      %p39 = scmp.eq.s32.totalorder %s22, 1
      %p40 = por %p38, %p39
      %p41 = scmp.ne.s32.totalorder %s30, %s31
      %p42 = scmp.eq.s32.totalorder %s22, 0
      %p43 = por %p41, %p42
      %p44 = scmp.ne.s32.totalorder %s30, %s31
      %p45 = scmp.eq.s32.totalorder %s23, 1
      %p46 = por %p44, %p45
      %p48 = scmp.ne.s32.totalorder %s31, %s47
      %p49 = scmp.eq.s32.totalorder %s23, 0
      %p50 = por %p48, %p49
      %s52 = sadd.s32 %s51, 1
      %p55 = scmp.eq.s32.totalorder %s17, 1
      %p56 = scmp.ne.s32.totalorder %s51, %s53
      %p57 = scmp.eq.s32.totalorder %s17, 0
      %p58 = por %p56, %p57
      %p59 = scmp.ne.s32.totalorder %s51, %s53
      %p60 = scmp.eq.s32.totalorder %s22, 1
      %p61 = por %p59, %p60
      %p62 = scmp.ne.s32.totalorder %s53, %s54
      %p63 = scmp.eq.s32.totalorder %s22, 0
      %p64 = por %p62, %p63
      %p65 = scmp.ne.s32.totalorder %s53, %s54
      %p66 = scmp.eq.s32.totalorder %s23, 1
      %p67 = por %p65, %p66
      %p69 = scmp.ne.s32.totalorder %s54, %s68
      %p70 = scmp.eq.s32.totalorder %s23, 0
      %p71 = por %p69, %p70
      %s73 = sadd.s32 %s72, 1
      %p76 = scmp.eq.s32.totalorder %s17, 1
      %p77 = scmp.ne.s32.totalorder %s72, %s74
      %p78 = scmp.eq.s32.totalorder %s17, 0
      %p79 = por %p77, %p78
      %p80 = scmp.ne.s32.totalorder %s72, %s74
      %p81 = scmp.eq.s32.totalorder %s22, 1
      %p82 = por %p80, %p81
      %p83 = scmp.ne.s32.totalorder %s74, %s75
      %p84 = scmp.eq.s32.totalorder %s22, 0
      %p85 = por %p83, %p84
      %p86 = scmp.ne.s32.totalorder %s74, %s75
      %p87 = scmp.eq.s32.totalorder %s23, 1
      %p88 = por %p86, %p87
      %p90 = scmp.ne.s32.totalorder %s75, %s89
      %p91 = scmp.eq.s32.totalorder %s23, 0
      %p92 = por %p90, %p91
      %s94 = sadd.s32 %s93, 1
      %p97 = scmp.eq.s32.totalorder %s17, 1
      %p98 = scmp.ne.s32.totalorder %s93, %s95
      %p99 = scmp.eq.s32.totalorder %s17, 0
      %p100 = por %p98, %p99
      %p101 = scmp.ne.s32.totalorder %s93, %s95
      %p102 = scmp.eq.s32.totalorder %s22, 1
      %p103 = por %p101, %p102
      %p104 = scmp.ne.s32.totalorder %s95, %s96
      %p105 = scmp.eq.s32.totalorder %s22, 0
      %p106 = por %p104, %p105
      %p107 = scmp.ne.s32.totalorder %s95, %s96
      %p108 = scmp.eq.s32.totalorder %s23, 1
      %p109 = por %p107, %p108
      %p111 = scmp.ne.s32.totalorder %s96, %s110
      %p112 = scmp.eq.s32.totalorder %s23, 0
      %p113 = por %p111, %p112
      %s115 = sadd.s32 %s114, 1
      %p118 = scmp.eq.s32.totalorder %s17, 1
      %p119 = scmp.ne.s32.totalorder %s114, %s116
      %p120 = scmp.eq.s32.totalorder %s17, 0
      %p121 = por %p119, %p120
      %p122 = scmp.ne.s32.totalorder %s114, %s116
      %p123 = scmp.eq.s32.totalorder %s22, 1
      %p124 = por %p122, %p123
      %p125 = scmp.ne.s32.totalorder %s116, %s117
      %p126 = scmp.eq.s32.totalorder %s22, 0
      %p127 = por %p125, %p126
      %p128 = scmp.ne.s32.totalorder %s116, %s117
      %p129 = scmp.eq.s32.totalorder %s23, 1
      %p130 = por %p128, %p129
      %p132 = scmp.ne.s32.totalorder %s117, %s131
      %p133 = scmp.eq.s32.totalorder %s23, 0
      %p134 = por %p132, %p133
      %s136 = sadd.s32 %s135, 1
      %p139 = scmp.eq.s32.totalorder %s17, 1
      %p140 = scmp.ne.s32.totalorder %s135, %s137
      %p141 = scmp.eq.s32.totalorder %s17, 0
      %p142 = por %p140, %p141
      %p143 = scmp.ne.s32.totalorder %s135, %s137
      %p144 = scmp.eq.s32.totalorder %s22, 1
      %p145 = por %p143, %p144
      %p146 = scmp.ne.s32.totalorder %s137, %s138
      %p147 = scmp.eq.s32.totalorder %s22, 0
      %p148 = por %p146, %p147
      %p149 = scmp.ne.s32.totalorder %s137, %s138
      %p150 = scmp.eq.s32.totalorder %s23, 1
      %p151 = por %p149, %p150
      %p153 = scmp.ne.s32.totalorder %s138, %s152
      %p154 = scmp.eq.s32.totalorder %s23, 0
      %p155 = por %p153, %p154
      %s157 = sadd.s32 %s156, 1
      %p160 = scmp.eq.s32.totalorder %s17, 1
      %p161 = scmp.ne.s32.totalorder %s156, %s158
      %p162 = scmp.eq.s32.totalorder %s17, 0
      %p163 = por %p161, %p162
      %p164 = scmp.ne.s32.totalorder %s156, %s158
      %p165 = scmp.eq.s32.totalorder %s22, 1
      %p166 = por %p164, %p165
      %p167 = scmp.ne.s32.totalorder %s158, %s159
      %p168 = scmp.eq.s32.totalorder %s22, 0
      %p169 = por %p167, %p168
      %p170 = scmp.ne.s32.totalorder %s158, %s159
      %p171 = scmp.eq.s32.totalorder %s23, 1
      %p172 = por %p170, %p171
      %p174 = scmp.ne.s32.totalorder %s159, %s173
      %p175 = scmp.eq.s32.totalorder %s23, 0
      %p176 = por %p174, %p175
      %s178 = sadd.s32 %s177, 1
      %p181 = scmp.eq.s32.totalorder %s17, 1
      %p182 = scmp.ne.s32.totalorder %s177, %s179
      %p183 = scmp.eq.s32.totalorder %s17, 0
      %p184 = por %p182, %p183
      %p185 = scmp.ne.s32.totalorder %s177, %s179
      %p186 = scmp.eq.s32.totalorder %s22, 1
      %p187 = por %p185, %p186
      %p188 = scmp.ne.s32.totalorder %s179, %s180
      %p189 = scmp.eq.s32.totalorder %s22, 0
      %p190 = por %p188, %p189
      %p191 = scmp.ne.s32.totalorder %s179, %s180
      %p192 = scmp.eq.s32.totalorder %s23, 1
      %p193 = por %p191, %p192
      %p195 = scmp.ne.s32.totalorder %s180, %s194
      %p196 = scmp.eq.s32.totalorder %s23, 0
      %p197 = por %p195, %p196
      %s198 = ssub.s32 %s17, %s24
      %p199 = scmp.eq.s32.totalorder %s198, 0
      %s201 = sadd.s32 %s200, 1
      %s202 = scalar_select %p199, %s200, %s201
      %p205 = pneg %p199
      %p206 = scmp.eq.s32.totalorder %s17, 1
      %p207 = por %p205, %p206
      %p208 = scmp.ne.s32.totalorder %s200, %s203
      %p209 = scmp.eq.s32.totalorder %s17, 0
      %p210 = por %p208, %p209
      %p211 = scmp.ne.s32.totalorder %s200, %s203
      %p212 = scmp.eq.s32.totalorder %s22, 1
      %p213 = por %p211, %p212
      %p214 = scmp.ne.s32.totalorder %s203, %s204
      %p215 = scmp.eq.s32.totalorder %s22, 0
      %p216 = por %p214, %p215
      %p217 = scmp.ne.s32.totalorder %s203, %s204
      %p218 = scmp.eq.s32.totalorder %s23, 1
      %p219 = por %p217, %p218
      %p221 = scmp.ne.s32.totalorder %s204, %s220
      %p222 = scmp.eq.s32.totalorder %s23, 0
      %p223 = por %p221, %p222
      %p224 = scmp.le.s32.totalorder 1, %s17
      %p225 = scmp.lt.s32.totalorder %s17, 3
      %p226 = pnand %p224, %p225
      %p227 = pneg %p226
      // Predicated region
      $region9: #{tpu_custom_call.1} parent=5 // pred_check
        _
      $region10: #{tpu_custom_call.1} parent=5 // pred_check_branch
        %229 = sbr.rel (%p226) target = $region12
      $region11: #{tpu_custom_call.1} parent=5 // pred_region
        %s230 = ssub.s32 %s17, 1
        // Predicated region
        $region13: #{tpu_custom_call.1} parent=11 // pred_check
          %p231 = pneg %p64
        $region14: #{tpu_custom_call.1} parent=11 // pred_check_branch
          %233 = sbr.rel (%p231) target = $region16
        $region15: #{tpu_custom_call.1} parent=11 // pred_region
          _
        $region16: #{tpu_custom_call.1} parent=11 // pred_fallthru
          _
        // Predicated region
        $region17: #{tpu_custom_call.1} parent=11 // pred_check
          %p234 = pneg %p85
        $region18: #{tpu_custom_call.1} parent=11 // pred_check_branch
          %236 = sbr.rel (%p234) target = $region20
        $region19: #{tpu_custom_call.1} parent=11 // pred_region
          _
        $region20: #{tpu_custom_call.1} parent=11 // pred_fallthru
          _
        // Predicated region
        $region21: #{tpu_custom_call.1} parent=11 // pred_check
          %p237 = pneg %p106
        $region22: #{tpu_custom_call.1} parent=11 // pred_check_branch
          %239 = sbr.rel (%p237) target = $region24
        $region23: #{tpu_custom_call.1} parent=11 // pred_region
          _
        $region24: #{tpu_custom_call.1} parent=11 // pred_fallthru
          _
        // Predicated region
        $region25: #{tpu_custom_call.1} parent=11 // pred_check
          %p240 = pneg %p127
        $region26: #{tpu_custom_call.1} parent=11 // pred_check_branch
          %242 = sbr.rel (%p240) target = $region28
        $region27: #{tpu_custom_call.1} parent=11 // pred_region
          _
        $region28: #{tpu_custom_call.1} parent=11 // pred_fallthru
          _
        // Predicated region
        $region29: #{tpu_custom_call.1} parent=11 // pred_check
          %p243 = pneg %p148
        $region30: #{tpu_custom_call.1} parent=11 // pred_check_branch
          %245 = sbr.rel (%p243) target = $region32
        $region31: #{tpu_custom_call.1} parent=11 // pred_region
          _
        $region32: #{tpu_custom_call.1} parent=11 // pred_fallthru
          _
        // Predicated region
        $region33: #{tpu_custom_call.1} parent=11 // pred_check
          %p246 = pneg %p169
        $region34: #{tpu_custom_call.1} parent=11 // pred_check_branch
          %248 = sbr.rel (%p246) target = $region36
        $region35: #{tpu_custom_call.1} parent=11 // pred_region
          _
        $region36: #{tpu_custom_call.1} parent=11 // pred_fallthru
          _
        // Predicated region
        $region37: #{tpu_custom_call.1} parent=11 // pred_check
          %p249 = pneg %p190
        $region38: #{tpu_custom_call.1} parent=11 // pred_check_branch
          %251 = sbr.rel (%p249) target = $region40
        $region39: #{tpu_custom_call.1} parent=11 // pred_region
          _
        $region40: #{tpu_custom_call.1} parent=11 // pred_fallthru
          _
      $region12: #{tpu_custom_call.1} parent=5 // pred_fallthru
        _
      %p252 = scmp.lt.s32.totalorder %s17, 2
      // Predicated region
      $region41: #{tpu_custom_call.1} parent=5 // pred_check
        %p253 = pneg %p252
      $region42: #{tpu_custom_call.1} parent=5 // pred_check_branch
        %255 = sbr.rel (%p253) target = $region44
      $region43: #{tpu_custom_call.1} parent=5 // pred_region
        // Predicated region
        $region45: #{tpu_custom_call.1} parent=43 // pred_check
          %p256 = pneg %p37
        $region46: #{tpu_custom_call.1} parent=43 // pred_check_branch
          %258 = sbr.rel (%p256) target = $region48
        $region47: #{tpu_custom_call.1} parent=43 // pred_region
          %p259 = scmp.lt.s32.totalorder %s17, 1
          %s260 = scalar_select %p259, %s17, 1
          %s261 = smul.addr %s260, 8
          %s262 = scalar_lea.vmem %s0, %s261
        $region48: #{tpu_custom_call.1} parent=43 // pred_fallthru
          _
      $region44: #{tpu_custom_call.1} parent=5 // pred_fallthru
        _
      %p263 = scmp.le.s32.totalorder 1, %s17
      %p264 = scmp.lt.s32.totalorder %s17, 3
      %p265 = pnand %p263, %p264
      %p266 = pneg %p265
      // Predicated region
      $region49: #{tpu_custom_call.1} parent=5 // pred_check
        _
      $region50: #{tpu_custom_call.1} parent=5 // pred_check_branch
        %268 = sbr.rel (%p265) target = $region52
      $region51: #{tpu_custom_call.1} parent=5 // pred_region
        %s269 = ssub.s32 %s17, 1
        %p270 = scmp.lt.s32.totalorder %s22, 1
        %s271 = scalar_select %p270, %s22, 1
        %s272 = smul.addr %s271, 8
        %s273 = scalar_lea.vmem %s0, %s272
        %p274 = pneg %p43
        %p275 = pneg %p40
        %p276 = pneg %p64
        %p277 = pneg %p61
        %p278 = pneg %p85
        %p279 = pneg %p82
        %p280 = pneg %p106
        %p281 = pneg %p103
        %p282 = pneg %p127
        %p283 = pneg %p124
        %p284 = pneg %p148
        %p285 = pneg %p145
        %p286 = pneg %p169
        %p287 = pneg %p166
        %p288 = pneg %p190
        %p289 = pneg %p187
        %p290 = pneg %p216
        %p291 = pneg %p213
        %s292 = sand.u32 %s203, 1
        %s293 = scalar_lea.sflag [#allocation3], %s292
        %s294 = sand.u32 %s203, 1
        %s295 = scalar_lea.vmem [#allocation2], %s294
        %p296 = scmp.lt.s32.totalorder %s22, 1
        %s297 = scalar_select %p296, %s22, 1
        %s298 = smul.addr %s297, 8
        %s299 = scalar_lea.vmem %s0, %s298
        %v300 = vld [vmem:[%s299] sm:$0xff]
        %v301 = vld [vmem:[%s1] sm:$0xff]
        %v302 = vld [vmem:[%s1 + $0x8] sm:$0xff]
        %v303 = vld [vmem:[%s1 + $0x10] sm:$0xff]
        %v304 = vld [vmem:[%s1 + $0x18] sm:$0xff]
        %v305 = vld [vmem:[%s1 + $0x20] sm:$0xff]
        %v306 = vld [vmem:[%s1 + $0x28] sm:$0xff]
        %v307 = vld [vmem:[%s1 + $0x30] sm:$0xff]
        %v308 = vld [vmem:[%s1 + $0x38] sm:$0xff]
        %vm309 = vcmask 64512
        %v311 = vsel %vm309, %v301, 0
        %v314 = vsel %vm309, %v302, 0
        %v317 = vsel %vm309, %v303, 0
        %v320 = vsel %vm309, %v304, 0
        %v323 = vsel %vm309, %v305, 0
        %v326 = vsel %vm309, %v306, 0
        %v329 = vsel %vm309, %v307, 0
        %v332 = vsel %vm309, %v308, 0
        %334 = vmatprep.subr.mxu0 0.0
        %335 = vmatpush1.msra.mxu0 %v300
        %336 = vmatprep.subr.mxu0 0.0
        %337 = vmatpush1.msra.mxu0 0.0
        %338 = vmatprep.subr.mxu0 0.0
        %339 = vmatpush1.msra.mxu0 0.0
        %340 = vmatprep.subr.mxu0 0.0
        %341 = vmatpush1.msra.mxu0 0.0
        %342 = vmatprep.subr.mxu0 0.0
        %343 = vmatpush1.msra.mxu0 0.0
        %344 = vmatprep.subr.mxu0 0.0
        %345 = vmatpush1.msra.mxu0 0.0
        %346 = vmatprep.subr.mxu0 0.0
        %347 = vmatpush1.msra.mxu0 0.0
        %348 = vmatprep.subr.mxu0 0.0
        %349 = vmatpush1.msra.mxu0 0.0
        %350 = vmatprep.subr.mxu0 0.0
        %351 = vmatpush1.msra.mxu0 0.0
        %352 = vmatprep.subr.mxu0 0.0
        %353 = vmatpush1.msra.mxu0 0.0
        %354 = vmatprep.subr.mxu0 0.0
        %355 = vmatpush1.msra.mxu0 0.0
        %356 = vmatprep.subr.mxu0 0.0
        %357 = vmatpush1.msra.mxu0 0.0
        %358 = vmatprep.subr.mxu0 0.0
        %359 = vmatpush1.msra.mxu0 0.0
        %360 = vmatprep.subr.mxu0 0.0
        %361 = vmatpush1.msra.mxu0 0.0
        %362 = vmatprep.subr.mxu0 0.0
        %363 = vmatpush1.msra.mxu0 0.0
        %364 = vmatprep.subr.mxu0 0.0
        %365 = vmatpush1.msra.mxu0 0.0
        %366 = vmatprep.subr.mxu0 0.0
        %367 = vmatpush1.msra.mxu0 0.0
        %368 = vmatprep.subr.mxu0 0.0
        %369 = vmatpush1.msra.mxu0 0.0
        %370 = vmatprep.subr.mxu0 0.0
        %371 = vmatpush1.msra.mxu0 0.0
        %372 = vmatprep.subr.mxu0 0.0
        %373 = vmatpush1.msra.mxu0 0.0
        %374 = vmatprep.subr.mxu0 0.0
        %375 = vmatpush1.msra.mxu0 0.0
        %376 = vmatprep.subr.mxu0 0.0
        %377 = vmatpush1.msra.mxu0 0.0
        %378 = vmatprep.subr.mxu0 0.0
        %379 = vmatpush1.msra.mxu0 0.0
        %380 = vmatprep.subr.mxu0 0.0
        %381 = vmatpush1.msra.mxu0 0.0
        %382 = vmatprep.subr.mxu0 0.0
        %383 = vmatpush1.msra.mxu0 0.0
        %384 = vmatprep.subr.mxu0 0.0
        %385 = vmatpush1.msra.mxu0 0.0
        %386 = vmatprep.subr.mxu0 0.0
        %387 = vmatpush1.msra.mxu0 0.0
        %388 = vmatprep.subr.mxu0 0.0
        %389 = vmatpush1.msra.mxu0 0.0
        %390 = vmatprep.subr.mxu0 0.0
        %391 = vmatpush1.msra.mxu0 0.0
        %392 = vmatprep.subr.mxu0 0.0
        %393 = vmatpush1.msra.mxu0 0.0
        %394 = vmatprep.subr.mxu0 0.0
        %395 = vmatpush1.msra.mxu0 0.0
        %396 = vmatprep.subr.mxu0 0.0
        %397 = vmatpush1.msra.mxu0 0.0
        %398 = vmatprep.mubr.f32.mxu0 0.0
        %399 = vmatmul.mubr.f32.gmra.mrb[0].mxu0 %v311
        %v400 = vpop.f32.mrb[0].mxu0
        %v401 = vadd.f32 0.0, %v400
        %v402 = vpop.f32.mrb[0].mxu0
        %403 = vmatprep.mubr.f32.mxu0 0.0
        %404 = vmatmul.mubr.f32.gmra.mrb[0].mxu0 %v314
        %v405 = vpop.f32.mrb[0].mxu0
        %v406 = vadd.f32 0.0, %v405
        %v407 = vpop.f32.mrb[0].mxu0
        %408 = vmatprep.mubr.f32.mxu0 0.0
        %409 = vmatmul.mubr.f32.gmra.mrb[0].mxu0 %v317
        %v410 = vpop.f32.mrb[0].mxu0
        %v411 = vadd.f32 0.0, %v410
        %v412 = vpop.f32.mrb[0].mxu0
        %413 = vmatprep.mubr.f32.mxu0 0.0
        %414 = vmatmul.mubr.f32.gmra.mrb[0].mxu0 %v320
        %v415 = vpop.f32.mrb[0].mxu0
        %v416 = vadd.f32 0.0, %v415
        %v417 = vpop.f32.mrb[0].mxu0
        %418 = vmatprep.mubr.f32.mxu0 0.0
        %419 = vmatmul.mubr.f32.gmra.mrb[0].mxu0 %v323
        %v420 = vpop.f32.mrb[0].mxu0
        %v421 = vadd.f32 0.0, %v420
        %v422 = vpop.f32.mrb[0].mxu0
        %423 = vmatprep.mubr.f32.mxu0 0.0
        %424 = vmatmul.mubr.f32.gmra.mrb[0].mxu0 %v326
        %v425 = vpop.f32.mrb[0].mxu0
        %v426 = vadd.f32 0.0, %v425
        %v427 = vpop.f32.mrb[0].mxu0
        %428 = vmatprep.mubr.f32.mxu0 0.0
        %429 = vmatmul.mubr.f32.gmra.mrb[0].mxu0 %v329
        %v430 = vpop.f32.mrb[0].mxu0
        %v431 = vadd.f32 0.0, %v430
        %v432 = vpop.f32.mrb[0].mxu0
        %433 = vmatprep.mubr.f32.mxu0 0.0
        %434 = vmatmul.mubr.f32.gmra.mrb[0].mxu0 %v332
        %v435 = vpop.f32.mrb[0].mxu0
        %v436 = vadd.f32 0.0, %v435
        %v437 = vpop.f32.mrb[0].mxu0
        %438 = vdwg.mxu0
        %v439 = vmax.f32 %v401, 0.0
        %v440 = vmax.f32 %v406, 0.0
        %v441 = vmax.f32 %v411, 0.0
        %v442 = vmax.f32 %v416, 0.0
        %v443 = vmax.f32 %v421, 0.0
        %v444 = vmax.f32 %v426, 0.0
        %v445 = vmax.f32 %v431, 0.0
        %v446 = vmax.f32 %v436, 0.0
        %v447 = vld [vmem:[%s2] sm:$0xff]
        %v448 = vld [vmem:[%s2 + $0x8] sm:$0xff]
        %v449 = vld [vmem:[%s2 + $0x10] sm:$0xff]
        %v450 = vld [vmem:[%s2 + $0x18] sm:$0xff]
        %v451 = vld [vmem:[%s2 + $0x20] sm:$0xff]
        %v452 = vld [vmem:[%s2 + $0x28] sm:$0xff]
        %v453 = vld [vmem:[%s2 + $0x30] sm:$0xff]
        %v454 = vld [vmem:[%s2 + $0x38] sm:$0xff]
        %v455 = vld [vmem:[%s2 + $0x40] sm:$0xff]
        %v456 = vld [vmem:[%s2 + $0x48] sm:$0xff]
        %v457 = vld [vmem:[%s2 + $0x50] sm:$0xff]
        %v458 = vld [vmem:[%s2 + $0x58] sm:$0xff]
        %v459 = vld [vmem:[%s2 + $0x60] sm:$0xff]
        %v460 = vld [vmem:[%s2 + $0x68] sm:$0xff]
        %v461 = vld [vmem:[%s2 + $0x70] sm:$0xff]
        %v462 = vld [vmem:[%s2 + $0x78] sm:$0xff]
        %v463 = vld [vmem:[%s3] sm:$0xff]
        %v464 = vld [vmem:[%s3 + $0x8] sm:$0xff]
        %v465 = vld [vmem:[%s3 + $0x10] sm:$0xff]
        %v466 = vld [vmem:[%s3 + $0x18] sm:$0xff]
        %v467 = vld [vmem:[%s3 + $0x20] sm:$0xff]
        %v468 = vld [vmem:[%s3 + $0x28] sm:$0xff]
        %v469 = vld [vmem:[%s3 + $0x30] sm:$0xff]
        %v470 = vld [vmem:[%s3 + $0x38] sm:$0xff]
        %v471 = vld [vmem:[%s3 + $0x40] sm:$0xff]
        %v472 = vld [vmem:[%s3 + $0x48] sm:$0xff]
        %v473 = vld [vmem:[%s3 + $0x50] sm:$0xff]
        %v474 = vld [vmem:[%s3 + $0x58] sm:$0xff]
        %v475 = vld [vmem:[%s3 + $0x60] sm:$0xff]
        %v476 = vld [vmem:[%s3 + $0x68] sm:$0xff]
        %v477 = vld [vmem:[%s3 + $0x70] sm:$0xff]
        %v478 = vld [vmem:[%s3 + $0x78] sm:$0xff]
        %480 = vset.pattern.permute.xlu0 0
        %481 = vperm.xlu0 %480, %v463
        %v482 = vpop.permute.xlu0 %481
        %485 = vset.pattern.permute.xlu0 0
        %486 = vperm.xlu0 %485, %v464
        %v487 = vpop.permute.xlu0 %486
        %490 = vset.pattern.permute.xlu0 0
        %491 = vperm.xlu0 %490, %v465
        %v492 = vpop.permute.xlu0 %491
        %495 = vset.pattern.permute.xlu0 0
        %496 = vperm.xlu0 %495, %v466
        %v497 = vpop.permute.xlu0 %496
        %500 = vset.pattern.permute.xlu0 0
        %501 = vperm.xlu0 %500, %v467
        %v502 = vpop.permute.xlu0 %501
        %505 = vset.pattern.permute.xlu0 0
        %506 = vperm.xlu0 %505, %v468
        %v507 = vpop.permute.xlu0 %506
        %510 = vset.pattern.permute.xlu0 0
        %511 = vperm.xlu0 %510, %v469
        %v512 = vpop.permute.xlu0 %511
        %515 = vset.pattern.permute.xlu0 0
        %516 = vperm.xlu0 %515, %v470
        %v517 = vpop.permute.xlu0 %516
        %520 = vset.pattern.permute.xlu0 0
        %521 = vperm.xlu0 %520, %v471
        %v522 = vpop.permute.xlu0 %521
        %525 = vset.pattern.permute.xlu0 0
        %526 = vperm.xlu0 %525, %v472
        %v527 = vpop.permute.xlu0 %526
        %530 = vset.pattern.permute.xlu0 0
        %531 = vperm.xlu0 %530, %v473
        %v532 = vpop.permute.xlu0 %531
        %535 = vset.pattern.permute.xlu0 0
        %536 = vperm.xlu0 %535, %v474
        %v537 = vpop.permute.xlu0 %536
        %540 = vset.pattern.permute.xlu0 0
        %541 = vperm.xlu0 %540, %v475
        %v542 = vpop.permute.xlu0 %541
        %545 = vset.pattern.permute.xlu0 0
        %546 = vperm.xlu0 %545, %v476
        %v547 = vpop.permute.xlu0 %546
        %550 = vset.pattern.permute.xlu0 0
        %551 = vperm.xlu0 %550, %v477
        %v552 = vpop.permute.xlu0 %551
        %555 = vset.pattern.permute.xlu0 0
        %556 = vperm.xlu0 %555, %v478
        %v557 = vpop.permute.xlu0 %556
        %vm559 = vcmask 523264
        %v561 = vsel %vm559, %v447, 0
        %v564 = vsel %vm559, %v448, 0
        %v567 = vsel %vm559, %v449, 0
        %v570 = vsel %vm559, %v450, 0
        %v573 = vsel %vm559, %v451, 0
        %v576 = vsel %vm559, %v452, 0
        %v579 = vsel %vm559, %v453, 0
        %v582 = vsel %vm559, %v454, 0
        %v585 = vsel %vm559, %v455, 0
        %v588 = vsel %vm559, %v456, 0
        %v591 = vsel %vm559, %v457, 0
        %v594 = vsel %vm559, %v458, 0
        %v597 = vsel %vm559, %v459, 0
        %v600 = vsel %vm559, %v460, 0
        %v603 = vsel %vm559, %v461, 0
        %v606 = vsel %vm559, %v462, 0
        %608 = vmatprep.subr.mxu0 0.0
        %609 = vmatpush1.msra.mxu0 %v439
        %610 = vmatprep.subr.mxu0 0.0
        %611 = vmatpush1.msra.mxu0 %v440
        %612 = vmatprep.subr.mxu0 0.0
        %613 = vmatpush1.msra.mxu0 %v441
        %614 = vmatprep.subr.mxu0 0.0
        %615 = vmatpush1.msra.mxu0 %v442
        %616 = vmatprep.subr.mxu0 0.0
        %617 = vmatpush1.msra.mxu0 %v443
        %618 = vmatprep.subr.mxu0 0.0
        %619 = vmatpush1.msra.mxu0 %v444
        %620 = vmatprep.subr.mxu0 0.0
        %621 = vmatpush1.msra.mxu0 %v445
        %622 = vmatprep.subr.mxu0 0.0
        %623 = vmatpush1.msra.mxu0 %v446
        %624 = vmatprep.subr.mxu0 0.0
        %625 = vmatpush1.msra.mxu0 0.0
        %626 = vmatprep.subr.mxu0 0.0
        %627 = vmatpush1.msra.mxu0 0.0
        %628 = vmatprep.subr.mxu0 0.0
        %629 = vmatpush1.msra.mxu0 0.0
        %630 = vmatprep.subr.mxu0 0.0
        %631 = vmatpush1.msra.mxu0 0.0
        %632 = vmatprep.subr.mxu0 0.0
        %633 = vmatpush1.msra.mxu0 0.0
        %634 = vmatprep.subr.mxu0 0.0
        %635 = vmatpush1.msra.mxu0 0.0
        %636 = vmatprep.subr.mxu0 0.0
        %637 = vmatpush1.msra.mxu0 0.0
        %638 = vmatprep.subr.mxu0 0.0
        %639 = vmatpush1.msra.mxu0 0.0
        %640 = vmatprep.subr.mxu0 0.0
        %641 = vmatpush1.msra.mxu0 0.0
        %642 = vmatprep.subr.mxu0 0.0
        %643 = vmatpush1.msra.mxu0 0.0
        %644 = vmatprep.subr.mxu0 0.0
        %645 = vmatpush1.msra.mxu0 0.0
        %646 = vmatprep.subr.mxu0 0.0
        %647 = vmatpush1.msra.mxu0 0.0
        %648 = vmatprep.subr.mxu0 0.0
        %649 = vmatpush1.msra.mxu0 0.0
        %650 = vmatprep.subr.mxu0 0.0
        %651 = vmatpush1.msra.mxu0 0.0
        %652 = vmatprep.subr.mxu0 0.0
        %653 = vmatpush1.msra.mxu0 0.0
        %654 = vmatprep.subr.mxu0 0.0
        %655 = vmatpush1.msra.mxu0 0.0
        %656 = vmatprep.subr.mxu0 0.0
        %657 = vmatpush1.msra.mxu0 0.0
        %658 = vmatprep.subr.mxu0 0.0
        %659 = vmatpush1.msra.mxu0 0.0
        %660 = vmatprep.subr.mxu0 0.0
        %661 = vmatpush1.msra.mxu0 0.0
        %662 = vmatprep.subr.mxu0 0.0
        %663 = vmatpush1.msra.mxu0 0.0
        %664 = vmatprep.subr.mxu0 0.0
        %665 = vmatpush1.msra.mxu0 0.0
        %666 = vmatprep.subr.mxu0 0.0
        %667 = vmatpush1.msra.mxu0 0.0
        %668 = vmatprep.subr.mxu0 0.0
        %669 = vmatpush1.msra.mxu0 0.0
        %670 = vmatprep.subr.mxu0 0.0
        %671 = vmatpush1.msra.mxu0 0.0
        %672 = vmatprep.mubr.f32.mxu0 0.0
        %673 = vmatmul.mubr.f32.gmra.mrb[0].mxu0 %v561
        %v674 = vpop.f32.mrb[0].mxu0
        %v675 = vadd.f32 %v482, %v674
        %v676 = vpop.f32.mrb[0].mxu0
        %677 = vmatprep.mubr.f32.mxu0 0.0
        %678 = vmatmul.mubr.f32.gmra.mrb[0].mxu0 %v564
        %v679 = vpop.f32.mrb[0].mxu0
        %v680 = vadd.f32 %v487, %v679
        %v681 = vpop.f32.mrb[0].mxu0
        %682 = vmatprep.mubr.f32.mxu0 0.0
        %683 = vmatmul.mubr.f32.gmra.mrb[0].mxu0 %v567
        %v684 = vpop.f32.mrb[0].mxu0
        %v685 = vadd.f32 %v492, %v684
        %v686 = vpop.f32.mrb[0].mxu0
        %687 = vmatprep.mubr.f32.mxu0 0.0
        %688 = vmatmul.mubr.f32.gmra.mrb[0].mxu0 %v570
        %v689 = vpop.f32.mrb[0].mxu0
        %v690 = vadd.f32 %v497, %v689
        %v691 = vpop.f32.mrb[0].mxu0
        %692 = vmatprep.mubr.f32.mxu0 0.0
        %693 = vmatmul.mubr.f32.gmra.mrb[0].mxu0 %v573
        %v694 = vpop.f32.mrb[0].mxu0
        %v695 = vadd.f32 %v502, %v694
        %v696 = vpop.f32.mrb[0].mxu0
        %697 = vmatprep.mubr.f32.mxu0 0.0
        %698 = vmatmul.mubr.f32.gmra.mrb[0].mxu0 %v576
        %v699 = vpop.f32.mrb[0].mxu0
        %v700 = vadd.f32 %v507, %v699
        %v701 = vpop.f32.mrb[0].mxu0
        %702 = vmatprep.mubr.f32.mxu0 0.0
        %703 = vmatmul.mubr.f32.gmra.mrb[0].mxu0 %v579
        %v704 = vpop.f32.mrb[0].mxu0
        %v705 = vadd.f32 %v512, %v704
        %v706 = vpop.f32.mrb[0].mxu0
        %707 = vmatprep.mubr.f32.mxu0 0.0
        %708 = vmatmul.mubr.f32.gmra.mrb[0].mxu0 %v582
        %v709 = vpop.f32.mrb[0].mxu0
        %v710 = vadd.f32 %v517, %v709
        %v711 = vpop.f32.mrb[0].mxu0
        %712 = vmatprep.mubr.f32.mxu0 0.0
        %713 = vmatmul.mubr.f32.gmra.mrb[0].mxu0 %v585
        %v714 = vpop.f32.mrb[0].mxu0
        %v715 = vadd.f32 %v522, %v714
        %v716 = vpop.f32.mrb[0].mxu0
        %717 = vmatprep.mubr.f32.mxu0 0.0
        %718 = vmatmul.mubr.f32.gmra.mrb[0].mxu0 %v588
        %v719 = vpop.f32.mrb[0].mxu0
        %v720 = vadd.f32 %v527, %v719
        %v721 = vpop.f32.mrb[0].mxu0
        %722 = vmatprep.mubr.f32.mxu0 0.0
        %723 = vmatmul.mubr.f32.gmra.mrb[0].mxu0 %v591
        %v724 = vpop.f32.mrb[0].mxu0
        %v725 = vadd.f32 %v532, %v724
        %v726 = vpop.f32.mrb[0].mxu0
        %727 = vmatprep.mubr.f32.mxu0 0.0
        %728 = vmatmul.mubr.f32.gmra.mrb[0].mxu0 %v594
        %v729 = vpop.f32.mrb[0].mxu0
        %v730 = vadd.f32 %v537, %v729
        %v731 = vpop.f32.mrb[0].mxu0
        %732 = vmatprep.mubr.f32.mxu0 0.0
        %733 = vmatmul.mubr.f32.gmra.mrb[0].mxu0 %v597
        %v734 = vpop.f32.mrb[0].mxu0
        %v735 = vadd.f32 %v542, %v734
        %v736 = vpop.f32.mrb[0].mxu0
        %737 = vmatprep.mubr.f32.mxu0 0.0
        %738 = vmatmul.mubr.f32.gmra.mrb[0].mxu0 %v600
        %v739 = vpop.f32.mrb[0].mxu0
        %v740 = vadd.f32 %v547, %v739
        %v741 = vpop.f32.mrb[0].mxu0
        %742 = vmatprep.mubr.f32.mxu0 0.0
        %743 = vmatmul.mubr.f32.gmra.mrb[0].mxu0 %v603
        %v744 = vpop.f32.mrb[0].mxu0
        %v745 = vadd.f32 %v552, %v744
        %v746 = vpop.f32.mrb[0].mxu0
        %747 = vmatprep.mubr.f32.mxu0 0.0
        %748 = vmatmul.mubr.f32.gmra.mrb[0].mxu0 %v606
        %v749 = vpop.f32.mrb[0].mxu0
        %v750 = vadd.f32 %v557, %v749
        %v751 = vpop.f32.mrb[0].mxu0
        %752 = vdwg.mxu0
        %v753 = vmax.f32 %v675, 0.0
        %v754 = vmax.f32 %v680, 0.0
        %v755 = vmax.f32 %v685, 0.0
        %v756 = vmax.f32 %v690, 0.0
        %v757 = vmax.f32 %v695, 0.0
        %v758 = vmax.f32 %v700, 0.0
        %v759 = vmax.f32 %v705, 0.0
        %v760 = vmax.f32 %v710, 0.0
        %v761 = vmax.f32 %v715, 0.0
        %v762 = vmax.f32 %v720, 0.0
        %v763 = vmax.f32 %v725, 0.0
        %v764 = vmax.f32 %v730, 0.0
        %v765 = vmax.f32 %v735, 0.0
        %v766 = vmax.f32 %v740, 0.0
        %v767 = vmax.f32 %v745, 0.0
        %v768 = vmax.f32 %v750, 0.0
        %v769 = vld [vmem:[%s4] sm:$0xff]
        %v770 = vld [vmem:[%s4 + $0x8] sm:$0xff]
        %v771 = vld [vmem:[%s4 + $0x10] sm:$0xff]
        %v772 = vld [vmem:[%s4 + $0x18] sm:$0xff]
        %v773 = vld [vmem:[%s4 + $0x20] sm:$0xff]
        %v774 = vld [vmem:[%s4 + $0x28] sm:$0xff]
        %v775 = vld [vmem:[%s4 + $0x30] sm:$0xff]
        %v776 = vld [vmem:[%s4 + $0x38] sm:$0xff]
        %v777 = vld [vmem:[%s5] sm:$0xff]
        %v778 = vld [vmem:[%s5 + $0x8] sm:$0xff]
        %v779 = vld [vmem:[%s5 + $0x10] sm:$0xff]
        %v780 = vld [vmem:[%s5 + $0x18] sm:$0xff]
        %v781 = vld [vmem:[%s5 + $0x20] sm:$0xff]
        %v782 = vld [vmem:[%s5 + $0x28] sm:$0xff]
        %v783 = vld [vmem:[%s5 + $0x30] sm:$0xff]
        %v784 = vld [vmem:[%s5 + $0x38] sm:$0xff]
        %786 = vset.pattern.permute.xlu0 0
        %787 = vperm.xlu0 %786, %v777
        %v788 = vpop.permute.xlu0 %787
        %791 = vset.pattern.permute.xlu0 0
        %792 = vperm.xlu0 %791, %v778
        %v793 = vpop.permute.xlu0 %792
        %796 = vset.pattern.permute.xlu0 0
        %797 = vperm.xlu0 %796, %v779
        %v798 = vpop.permute.xlu0 %797
        %801 = vset.pattern.permute.xlu0 0
        %802 = vperm.xlu0 %801, %v780
        %v803 = vpop.permute.xlu0 %802
        %806 = vset.pattern.permute.xlu0 0
        %807 = vperm.xlu0 %806, %v781
        %v808 = vpop.permute.xlu0 %807
        %811 = vset.pattern.permute.xlu0 0
        %812 = vperm.xlu0 %811, %v782
        %v813 = vpop.permute.xlu0 %812
        %816 = vset.pattern.permute.xlu0 0
        %817 = vperm.xlu0 %816, %v783
        %v818 = vpop.permute.xlu0 %817
        %821 = vset.pattern.permute.xlu0 0
        %822 = vperm.xlu0 %821, %v784
        %v823 = vpop.permute.xlu0 %822
        %825 = vmatprep.subr.mxu0 0.0
        %826 = vmatpush1.msra.mxu0 %v753
        %827 = vmatprep.subr.mxu0 0.0
        %828 = vmatpush1.msra.mxu0 %v754
        %829 = vmatprep.subr.mxu0 0.0
        %830 = vmatpush1.msra.mxu0 %v755
        %831 = vmatprep.subr.mxu0 0.0
        %832 = vmatpush1.msra.mxu0 %v756
        %833 = vmatprep.subr.mxu0 0.0
        %834 = vmatpush1.msra.mxu0 %v757
        %835 = vmatprep.subr.mxu0 0.0
        %836 = vmatpush1.msra.mxu0 %v758
        %837 = vmatprep.subr.mxu0 0.0
        %838 = vmatpush1.msra.mxu0 %v759
        %839 = vmatprep.subr.mxu0 0.0
        %840 = vmatpush1.msra.mxu0 %v760
        %841 = vmatprep.subr.mxu0 0.0
        %842 = vmatpush1.msra.mxu0 %v761
        %843 = vmatprep.subr.mxu0 0.0
        %844 = vmatpush1.msra.mxu0 %v762
        %845 = vmatprep.subr.mxu0 0.0
        %846 = vmatpush1.msra.mxu0 %v763
        %847 = vmatprep.subr.mxu0 0.0
        %848 = vmatpush1.msra.mxu0 %v764
        %849 = vmatprep.subr.mxu0 0.0
        %850 = vmatpush1.msra.mxu0 %v765
        %851 = vmatprep.subr.mxu0 0.0
        %852 = vmatpush1.msra.mxu0 %v766
        %853 = vmatprep.subr.mxu0 0.0
        %854 = vmatpush1.msra.mxu0 %v767
        %855 = vmatprep.subr.mxu0 0.0
        %856 = vmatpush1.msra.mxu0 %v768
        %857 = vmatprep.subr.mxu0 0.0
        %858 = vmatpush1.msra.mxu0 0.0
        %859 = vmatprep.subr.mxu0 0.0
        %860 = vmatpush1.msra.mxu0 0.0
        %861 = vmatprep.subr.mxu0 0.0
        %862 = vmatpush1.msra.mxu0 0.0
        %863 = vmatprep.subr.mxu0 0.0
        %864 = vmatpush1.msra.mxu0 0.0
        %865 = vmatprep.subr.mxu0 0.0
        %866 = vmatpush1.msra.mxu0 0.0
        %867 = vmatprep.subr.mxu0 0.0
        %868 = vmatpush1.msra.mxu0 0.0
        %869 = vmatprep.subr.mxu0 0.0
        %870 = vmatpush1.msra.mxu0 0.0
        %871 = vmatprep.subr.mxu0 0.0
        %872 = vmatpush1.msra.mxu0 0.0
        %873 = vmatprep.subr.mxu0 0.0
        %874 = vmatpush1.msra.mxu0 0.0
        %875 = vmatprep.subr.mxu0 0.0
        %876 = vmatpush1.msra.mxu0 0.0
        %877 = vmatprep.subr.mxu0 0.0
        %878 = vmatpush1.msra.mxu0 0.0
        %879 = vmatprep.subr.mxu0 0.0
        %880 = vmatpush1.msra.mxu0 0.0
        %881 = vmatprep.subr.mxu0 0.0
        %882 = vmatpush1.msra.mxu0 0.0
        %883 = vmatprep.subr.mxu0 0.0
        %884 = vmatpush1.msra.mxu0 0.0
        %885 = vmatprep.subr.mxu0 0.0
        %886 = vmatpush1.msra.mxu0 0.0
        %887 = vmatprep.subr.mxu0 0.0
        %888 = vmatpush1.msra.mxu0 0.0
        %889 = vmatprep.mubr.f32.mxu0 0.0
        %890 = vmatmul.mubr.f32.gmra.mrb[0].mxu0 %v769
        %v891 = vpop.f32.mrb[0].mxu0
        %v892 = vadd.f32 %v788, %v891
        %v893 = vpop.f32.mrb[0].mxu0
        %894 = vmatprep.mubr.f32.mxu0 0.0
        %895 = vmatmul.mubr.f32.gmra.mrb[0].mxu0 %v770
        %v896 = vpop.f32.mrb[0].mxu0
        %v897 = vadd.f32 %v793, %v896
        %v898 = vpop.f32.mrb[0].mxu0
        %899 = vmatprep.mubr.f32.mxu0 0.0
        %900 = vmatmul.mubr.f32.gmra.mrb[0].mxu0 %v771
        %v901 = vpop.f32.mrb[0].mxu0
        %v902 = vadd.f32 %v798, %v901
        %v903 = vpop.f32.mrb[0].mxu0
        %904 = vmatprep.mubr.f32.mxu0 0.0
        %905 = vmatmul.mubr.f32.gmra.mrb[0].mxu0 %v772
        %v906 = vpop.f32.mrb[0].mxu0
        %v907 = vadd.f32 %v803, %v906
        %v908 = vpop.f32.mrb[0].mxu0
        %909 = vmatprep.mubr.f32.mxu0 0.0
        %910 = vmatmul.mubr.f32.gmra.mrb[0].mxu0 %v773
        %v911 = vpop.f32.mrb[0].mxu0
        %v912 = vadd.f32 %v808, %v911
        %v913 = vpop.f32.mrb[0].mxu0
        %914 = vmatprep.mubr.f32.mxu0 0.0
        %915 = vmatmul.mubr.f32.gmra.mrb[0].mxu0 %v774
        %v916 = vpop.f32.mrb[0].mxu0
        %v917 = vadd.f32 %v813, %v916
        %v918 = vpop.f32.mrb[0].mxu0
        %919 = vmatprep.mubr.f32.mxu0 0.0
        %920 = vmatmul.mubr.f32.gmra.mrb[0].mxu0 %v775
        %v921 = vpop.f32.mrb[0].mxu0
        %v922 = vadd.f32 %v818, %v921
        %v923 = vpop.f32.mrb[0].mxu0
        %924 = vmatprep.mubr.f32.mxu0 0.0
        %925 = vmatmul.mubr.f32.gmra.mrb[0].mxu0 %v776
        %v926 = vpop.f32.mrb[0].mxu0
        %v927 = vadd.f32 %v823, %v926
        %v928 = vpop.f32.mrb[0].mxu0
        %929 = vdwg.mxu0
        %v930 = vmax.f32 %v892, 0.0
        %v931 = vmax.f32 %v897, 0.0
        %v932 = vmax.f32 %v902, 0.0
        %v933 = vmax.f32 %v907, 0.0
        %v934 = vmax.f32 %v912, 0.0
        %v935 = vmax.f32 %v917, 0.0
        %v936 = vmax.f32 %v922, 0.0
        %v937 = vmax.f32 %v927, 0.0
        %v938 = vld [vmem:[%s6] sm:$0xff]
        %v939 = vld [vmem:[%s7] sm:$0xff]
        %941 = vset.pattern.permute.xlu0 0
        %942 = vperm.xlu0 %941, %v939
        %v943 = vpop.permute.xlu0 %942
        %v946 = vsel %vm559, %v938, 0
        %948 = vmatprep.subr.mxu0 0.0
        %949 = vmatpush1.msra.mxu0 %v930
        %950 = vmatprep.subr.mxu0 0.0
        %951 = vmatpush1.msra.mxu0 %v931
        %952 = vmatprep.subr.mxu0 0.0
        %953 = vmatpush1.msra.mxu0 %v932
        %954 = vmatprep.subr.mxu0 0.0
        %955 = vmatpush1.msra.mxu0 %v933
        %956 = vmatprep.subr.mxu0 0.0
        %957 = vmatpush1.msra.mxu0 %v934
        %958 = vmatprep.subr.mxu0 0.0
        %959 = vmatpush1.msra.mxu0 %v935
        %960 = vmatprep.subr.mxu0 0.0
        %961 = vmatpush1.msra.mxu0 %v936
        %962 = vmatprep.subr.mxu0 0.0
        %963 = vmatpush1.msra.mxu0 %v937
        %964 = vmatprep.subr.mxu0 0.0
        %965 = vmatpush1.msra.mxu0 0.0
        %966 = vmatprep.subr.mxu0 0.0
        %967 = vmatpush1.msra.mxu0 0.0
        %968 = vmatprep.subr.mxu0 0.0
        %969 = vmatpush1.msra.mxu0 0.0
        %970 = vmatprep.subr.mxu0 0.0
        %971 = vmatpush1.msra.mxu0 0.0
        %972 = vmatprep.subr.mxu0 0.0
        %973 = vmatpush1.msra.mxu0 0.0
        %974 = vmatprep.subr.mxu0 0.0
        %975 = vmatpush1.msra.mxu0 0.0
        %976 = vmatprep.subr.mxu0 0.0
        %977 = vmatpush1.msra.mxu0 0.0
        %978 = vmatprep.subr.mxu0 0.0
        %979 = vmatpush1.msra.mxu0 0.0
        %980 = vmatprep.subr.mxu0 0.0
        %981 = vmatpush1.msra.mxu0 0.0
        %982 = vmatprep.subr.mxu0 0.0
        %983 = vmatpush1.msra.mxu0 0.0
        %984 = vmatprep.subr.mxu0 0.0
        %985 = vmatpush1.msra.mxu0 0.0
        %986 = vmatprep.subr.mxu0 0.0
        %987 = vmatpush1.msra.mxu0 0.0
        %988 = vmatprep.subr.mxu0 0.0
        %989 = vmatpush1.msra.mxu0 0.0
        %990 = vmatprep.subr.mxu0 0.0
        %991 = vmatpush1.msra.mxu0 0.0
        %992 = vmatprep.subr.mxu0 0.0
        %993 = vmatpush1.msra.mxu0 0.0
        %994 = vmatprep.subr.mxu0 0.0
        %995 = vmatpush1.msra.mxu0 0.0
        %996 = vmatprep.subr.mxu0 0.0
        %997 = vmatpush1.msra.mxu0 0.0
        %998 = vmatprep.subr.mxu0 0.0
        %999 = vmatpush1.msra.mxu0 0.0
        %1000 = vmatprep.subr.mxu0 0.0
        %1001 = vmatpush1.msra.mxu0 0.0
        %1002 = vmatprep.subr.mxu0 0.0
        %1003 = vmatpush1.msra.mxu0 0.0
        %1004 = vmatprep.subr.mxu0 0.0
        %1005 = vmatpush1.msra.mxu0 0.0
        %1006 = vmatprep.subr.mxu0 0.0
        %1007 = vmatpush1.msra.mxu0 0.0
        %1008 = vmatprep.subr.mxu0 0.0
        %1009 = vmatpush1.msra.mxu0 0.0
        %1010 = vmatprep.subr.mxu0 0.0
        %1011 = vmatpush1.msra.mxu0 0.0
        %1012 = vmatprep.mubr.f32.mxu0 0.0
        %1013 = vmatmul.mubr.f32.gmra.mrb[0].mxu0 %v946
        %v1014 = vpop.f32.mrb[0].mxu0
        %v1015 = vadd.f32 %v943, %v1014
        %v1016 = vpop.f32.mrb[0].mxu0
        %1017 = vdwg.mxu0
        %1018 = vst [vmem:[%s295] sm:$0x1] %v1015
        %s1019 = sand.u32 %s203, 1
        %s1020 = scalar_lea.sflag [#allocation3], %s1019
        %s1021 = sand.u32 %s203, 1
        %s1022 = scalar_lea.vmem [#allocation2], %s1021
        // Predicated region
        $region53: #{tpu_custom_call.1} parent=51 // pred_check
          %p1023 = pneg %p213
        $region54: #{tpu_custom_call.1} parent=51 // pred_check_branch
          %1025 = sbr.rel (%p1023) target = $region56
        $region55: #{tpu_custom_call.1} parent=51 // pred_region
          %s1027 = ssub.s32 16, 16
          %1028 = vsyncadd %s1020, %s1027
          %s1029 = smul.addr %s22, 16
          %s1030 = scalar_lea.hbm %s8, %s1029
          %s1032 = sshll.u32 %s1022, 4
          %s1033 = int_to_ptr.vmem [resolvable:$true] %s1032
          %1035 = dma.vmem_to_hbm [thread:$0]  %s1033, 16, %s1030, %s1020
        $region56: #{tpu_custom_call.1} parent=51 // pred_fallthru
          _
      $region52: #{tpu_custom_call.1} parent=5 // pred_fallthru
        _
      %p1036 = scmp.le.s32.totalorder 2, %s17
      // Predicated region
      $region57: #{tpu_custom_call.1} parent=5 // pred_check
        %p1037 = pneg %p1036
      $region58: #{tpu_custom_call.1} parent=5 // pred_check_branch
        %1039 = sbr.rel (%p1037) target = $region60
      $region59: #{tpu_custom_call.1} parent=5 // pred_region
        %s1040 = ssub.s32 %s17, 2
        // Predicated region
        $region61: #{tpu_custom_call.1} parent=59 // pred_check
          %p1041 = pneg %p219
        $region62: #{tpu_custom_call.1} parent=59 // pred_check_branch
          %1043 = sbr.rel (%p1041) target = $region64
        $region63: #{tpu_custom_call.1} parent=59 // pred_region
          %s1044 = sand.u32 %s204, 1
          %s1045 = scalar_lea.sflag [#allocation3], %s1044
          %s1046 = sand.u32 %s204, 1
          %s1047 = scalar_lea.vmem [#allocation2], %s1046
          %1048 = dma.done %s1045, 16
        $region64: #{tpu_custom_call.1} parent=59 // pred_fallthru
          _
      $region60: #{tpu_custom_call.1} parent=5 // pred_fallthru
        _
    $region6: #{tpu_custom_call.1} parent=1 // loop_footer
      %s21 = sadd.s32 1, %s17
    $region7: #{tpu_custom_call.1} parent=1 // loop_footer_branch
      %16 = sbr.rel target = $region3
    $region8: #{tpu_custom_call.1} parent=1 // loop_exit
      _
    %1049 = vsyncpa [#allocation3], 1
    %s1050 = scalar_lea.sflag [#allocation3], 1
    %1051 = vsyncpa %s1050, 1

</llo_original>
